<compile_context>
chip_gen: v6e
topology: v6e:2x2x1
jax: 0.10.0
libtpu: 0.0.40
codegen_flags: <defaults>
</compile_context>

<pallas_src>
import functools

import jax
import jax.numpy as jnp
from jax.experimental import pallas as pl
from jax.experimental.pallas import tpu as pltpu


def _round_up(n, m):
    return ((n + m - 1) // m) * m


def _pick_block_b(batch, x_width, out_cols, vmem_budget_bytes=6 << 20):
    """Batch tile: big enough to amortize ~0.35us/grid-step overhead, small
    enough that double-buffered in/out tiles + f32 intermediates fit every
    generation's default scoped VMEM, and >= 2 grid steps (v7x megacore)."""
    per_row = (x_width + out_cols) * 4 * 2          # f32 in+out, double-buffered
    cap = max(8, min(2048, (vmem_budget_bytes // per_row) // 8 * 8))
    if batch <= 8:
        return 8
    tb = _round_up((batch + 1) // 2, 8)             # at least 2 grid steps
    return int(min(cap, tb))


# ---------------------------------------------------------------------------
# Kernel
# ---------------------------------------------------------------------------
def _fused_gmm_kernel(x_ref, w1_ref, b1_ref, w2_ref, b2_ref, out_ref, *, sd_start):
    """One batch tile of the fused MDN forward.

    x_ref  : (TB, x_width)      full (unmasked) input rows
    w1_ref : (x_width, Hpad)    [w1p | w1n], masked input rows zeroed, lane-padded
    b1_ref : (1, Hpad)
    w2_ref : (Hpad, out_cols)   block-diag [w2p -> logits | w2n -> mean,raw_sd]
    b2_ref : (1, out_cols)
    out_ref: (TB, out_cols)     [logits | mean | exp(raw_sd) | pad], 128 lanes
    """
    # ---- fused layer 1 (both heads' hidden layers in one MXU pass) ----
    x = x_ref[...].astype(w1_ref.dtype)
    h = jnp.dot(x, w1_ref[...], preferred_element_type=jnp.float32) + b1_ref[...]
    # ELU (alpha=1); clamp the exp argument so positive lanes never overflow
    h = jnp.where(h > 0, h, jnp.exp(jnp.minimum(h, 0.0)) - 1.0)

    # ---- fused layer 2 -> tight slab [logits | mean | raw_sd | pad] ----
    slab = (jnp.dot(h.astype(w2_ref.dtype), w2_ref[...],
                    preferred_element_type=jnp.float32) + b2_ref[...])

    # exp() only on the raw_sd (and harmless zero-pad) lanes -> Normal scale;
    # logits / mean lanes pass through untouched.  Single unmasked 128-lane store.
    lane = jax.lax.broadcasted_iota(jnp.int32, slab.shape, dimension=1)
    out_ref[...] = jnp.where(lane >= sd_start, jnp.exp(slab), slab)


# ---------------------------------------------------------------------------
# Host-side weight packing (done once, outside the hot path)
# ---------------------------------------------------------------------------
def pack_gmm_params(params, *, x_width, curr_in, dim_out, n_components,
                    mxu_dtype=jnp.float32):
    """Fuse / pad the four Linear layers into lane-dense MXU operands.

    W1: (x_width, Hpad)   rows >= curr_in are zero  -> implements make_mask
                          cols [0,C) = w1p, cols [C,2C) = w1n
    W2: (Hpad, out_cols)  block-diagonal:
                          rows [0,C)  x cols [0,K)          = w2p  (logits)
                          rows [C,2C) x cols [K, K+2*K*D)   = w2n  (mean | raw_sd)
    out_cols = round_up(K + 2*K*D, 128): one tight 128-lane output segment.
    """
    C, K, D = curr_in, n_components, dim_out
    nm = K * D
    hpad = _round_up(2 * C, 128)
    out_cols = _round_up(K + 2 * nm, 128)

    w1 = jnp.zeros((x_width, hpad), jnp.float32)
    w1 = w1.at[:C, :C].set(params["w1p"])
    w1 = w1.at[:C, C:2 * C].set(params["w1n"])
    b1 = jnp.zeros((1, hpad), jnp.float32)
    b1 = b1.at[:, :C].set(params["b1p"].reshape(1, -1))
    b1 = b1.at[:, C:2 * C].set(params["b1n"].reshape(1, -1))

    w2 = jnp.zeros((hpad, out_cols), jnp.float32)
    w2 = w2.at[:C, :K].set(params["w2p"])
    w2 = w2.at[C:2 * C, K:K + 2 * nm].set(params["w2n"])      # [mean | raw_sd]
    b2 = jnp.zeros((1, out_cols), jnp.float32)
    b2 = b2.at[:, :K].set(params["b2p"].reshape(1, -1))
    b2 = b2.at[:, K:K + 2 * nm].set(params["b2n"].reshape(1, -1))

    return dict(w1=w1.astype(mxu_dtype), b1=b1,               # biases stay f32
                w2=w2.astype(mxu_dtype), b2=b2,
                hpad=hpad, out_cols=out_cols, sd_start=K + nm)


# ---------------------------------------------------------------------------
# Forward wrapper
# ---------------------------------------------------------------------------
def single_task_net_forward(x, packed, *, dim_out, n_components, block_b=None):
    """Forward of SingleTaskNet(dim_in, dim_out, dim_window, mask_mode=None,
    encoder_arch=None, decoder_arch=('gmm', n_components)).

    Returns (pi_logits, pi_probs, mean, scale)."""
    B, x_width = x.shape
    K, D = n_components, dim_out
    nm = K * D
    hpad, out_cols, sd_start = packed["hpad"], packed["out_cols"], packed["sd_start"]

    if block_b is None:
        block_b = _pick_block_b(B, x_width, out_cols)
    b_pad = _round_up(B, block_b)
    if b_pad != B:
        x = jnp.pad(x, ((0, b_pad - B), (0, 0)))   # zero rows, sliced off below
    grid = (b_pad // block_b,)

    kernel = functools.partial(_fused_gmm_kernel, sd_start=sd_start)
    slab = pl.pallas_call(
        kernel,
        out_shape=jax.ShapeDtypeStruct((b_pad, out_cols), jnp.float32),
        grid=grid,
        in_specs=[
            pl.BlockSpec((block_b, x_width), lambda i: (i, 0)),   # batch-tiled x
            pl.BlockSpec((x_width, hpad), lambda i: (0, 0)),      # VMEM-resident weights
            pl.BlockSpec((1, hpad), lambda i: (0, 0)),
            pl.BlockSpec((hpad, out_cols), lambda i: (0, 0)),
            pl.BlockSpec((1, out_cols), lambda i: (0, 0)),
        ],
        out_specs=pl.BlockSpec((block_b, out_cols), lambda i: (i, 0)),
        compiler_params=pltpu.CompilerParams(
            dimension_semantics=("parallel",)),                   # megacore over batch
    )(x, packed["w1"], packed["b1"], packed["w2"], packed["b2"])

    # cheap, tight unpack (only 128 cols/row re-read); exact softmax in wrapper
    slab = slab[:B]
    logits = slab[:, :K]
    probs = jax.nn.softmax(logits, axis=-1)
    mean = slab[:, K:K + nm].reshape(B, K, D)
    scale = slab[:, K + nm:K + 2 * nm].reshape(B, K, D)
    return logits, probs, mean, scale


# ---------------------------------------------------------------------------
# Pure-JAX reference & param init (PyTorch nn.Linear default init)
# ---------------------------------------------------------------------------
def _reference_forward(x, params, *, dim_in, dim_out, n_components):
    out = x[:, :-dim_in]                       # make_mask, mask_mode=None
    elu = lambda v: jnp.where(v > 0, v, jnp.exp(v) - 1.0)
    h_p = elu(out @ params["w1p"] + params["b1p"])
    logits = h_p @ params["w2p"] + params["b2p"]
    probs = jax.nn.softmax(logits, axis=-1)
    h_n = elu(out @ params["w1n"] + params["b1n"])
    p = h_n @ params["w2n"] + params["b2n"]
    half = p.shape[1] // 2
    mean = p[:, :half].reshape(out.shape[0], n_components, dim_out)
    scale = jnp.exp(p[:, half:]).reshape(out.shape[0], n_components, dim_out)
    return logits, probs, mean, scale


def _init_params(key, curr_in, dim_out, n_components):
    def linear(k, fan_in, fan_out):
        kw, kb = jax.random.split(k)
        bound = 1.0 / jnp.sqrt(fan_in)
        w = jax.random.uniform(kw, (fan_in, fan_out), jnp.float32, -bound, bound)
        b = jax.random.uniform(kb, (1, fan_out), jnp.float32, -bound, bound)
        return w, b

    k1, k2, k3, k4 = jax.random.split(key, 4)
    w1p, b1p = linear(k1, curr_in, curr_in)                       # pi hidden
    w2p, b2p = linear(k2, curr_in, n_components)                  # pi logits
    w1n, b1n = linear(k3, curr_in, curr_in)                       # normal hidden
    w2n, b2n = linear(k4, curr_in, 2 * dim_out * n_components)    # mean / raw sd
    return dict(w1p=w1p, b1p=b1p, w2p=w2p, b2p=b2p,
                w1n=w1n, b1n=b1n, w2n=w2n, b2n=b2n)


if __name__ == "__main__":
    batch = 64
    dim_in = 8
    dim_window = 1
    dim_out = 4
    n_components = 5
    curr_in = dim_in * dim_window              # mask_mode is None
    x_width = dim_in * (dim_window + 1)

    key = jax.random.PRNGKey(0)
    kx, kp = jax.random.split(key)
    x = jax.random.normal(kx, (batch, x_width), jnp.float32)
    params = _init_params(kp, curr_in, dim_out, n_components)

    refs = _reference_forward(x, params, dim_in=dim_in, dim_out=dim_out,
                              n_components=n_components)
    names = ("logits", "probs", "mean", "scale")

    # ---- f32 MXU path (matches reference; probs now exact softmax) ----
    packed_f32 = pack_gmm_params(params, x_width=x_width, curr_in=curr_in,
                                 dim_out=dim_out, n_components=n_components,
                                 mxu_dtype=jnp.float32)
    outs = jax.block_until_ready(single_task_net_forward(
        x, packed_f32, dim_out=dim_out, n_components=n_components))
    for name, o, r in zip(names, outs, refs):
        assert o.shape == r.shape, f"{name}: shape {o.shape} vs {r.shape}"
        assert jnp.allclose(o, r, atol=1e-5, rtol=1e-5), \
            f"{name} mismatch vs reference (f32 path)"

    # ---- bf16 MXU operand path (optional, for production batches on v6e/v7x;
    #      f32 accumulate + f32 elementwise, so it is also safe on v5e) ----
    packed_bf16 = pack_gmm_params(params, x_width=x_width, curr_in=curr_in,
                                  dim_out=dim_out, n_components=n_components,
                                  mxu_dtype=jnp.bfloat16)
    outs16 = jax.block_until_ready(single_task_net_forward(
        x, packed_bf16, dim_out=dim_out, n_components=n_components))
    for name, o, r in zip(names, outs16, refs):
        assert o.shape == r.shape
        assert jnp.allclose(o, r, atol=0.1, rtol=0.1), \
            f"{name} mismatch vs reference (bf16 path)"

    # ---- odd / non-power-of-two batch exercises the host-side pad path ----
    x_odd = jax.random.normal(kx, (37, x_width), jnp.float32)
    refs_odd = _reference_forward(x_odd, params, dim_in=dim_in, dim_out=dim_out,
                                  n_components=n_components)
    outs_odd = jax.block_until_ready(single_task_net_forward(
        x_odd, packed_f32, dim_out=dim_out, n_components=n_components))
    for name, o, r in zip(names, outs_odd, refs_odd):
        assert o.shape == r.shape
        assert jnp.allclose(o, r, atol=1e-5, rtol=1e-5), \
            f"{name} mismatch vs reference (odd-batch path)"

    print("KERNEL_OK")
</pallas_src>

<mosaic_0001>
module attributes {stable_mosaic.version = 11 : i64} {
  func.func @_fused_gmm_kernel(%arg0: i32, %arg1: memref<32x16xf32, #tpu.memory_space<vmem>>, %arg2: memref<16x128xf32, #tpu.memory_space<vmem>>, %arg3: memref<1x128xf32, #tpu.memory_space<vmem>>, %arg4: memref<128x128xf32, #tpu.memory_space<vmem>>, %arg5: memref<1x128xf32, #tpu.memory_space<vmem>>, %arg6: memref<32x128xf32, #tpu.memory_space<vmem>>) attributes {dimension_semantics = [#tpu.dimension_semantics<parallel>], iteration_bounds = array<i64: 2>, scalar_prefetch = 0 : i64, scratch_operands = 0 : i64, tpu.core_type = #tpu.core_type<tc>, window_params = [{transform_indices = @transform_0, window_bounds = array<i64: 32, 16>}, {pipeline_mode = #tpu.pipeline_mode<synchronous>, transform_indices = @transform_1, window_bounds = array<i64: 16, 128>}, {pipeline_mode = #tpu.pipeline_mode<synchronous>, transform_indices = @transform_2, window_bounds = array<i64: 1, 128>}, {pipeline_mode = #tpu.pipeline_mode<synchronous>, transform_indices = @transform_3, window_bounds = array<i64: 128, 128>}, {pipeline_mode = #tpu.pipeline_mode<synchronous>, transform_indices = @transform_4, window_bounds = array<i64: 1, 128>}, {transform_indices = @transform_5, window_bounds = array<i64: 32, 128>}]} {
    %c0 = arith.constant 0 : index
    %c0_0 = arith.constant 0 : index
    %0 = vector.load %arg1[%c0, %c0_0] : memref<32x16xf32, #tpu.memory_space<vmem>>, vector<32x16xf32>
    %c0_1 = arith.constant 0 : index
    %c0_2 = arith.constant 0 : index
    %1 = vector.load %arg2[%c0_1, %c0_2] : memref<16x128xf32, #tpu.memory_space<vmem>>, vector<16x128xf32>
    %cst = arith.constant dense<0.000000e+00> : vector<32x128xf32>
    %2 = tpu.matmul %0, %1, %cst {dimension_numbers = #tpu.dot_dimension_numbers<[1], [0], [0], [1], [0, 0, 1, 1], [], []>} : vector<32x16xf32>, vector<16x128xf32>, vector<32x128xf32> -> vector<32x128xf32>
    %c0_3 = arith.constant 0 : index
    %c0_4 = arith.constant 0 : index
    %3 = vector.load %arg3[%c0_3, %c0_4] : memref<1x128xf32, #tpu.memory_space<vmem>>, vector<1x128xf32>
    %4 = vector.broadcast %3 : vector<1x128xf32> to vector<32x128xf32>
    %5 = arith.addf %2, %4 : vector<32x128xf32>
    %cst_5 = arith.constant 0.000000e+00 : f32
    %6 = vector.broadcast %cst_5 : f32 to vector<32x128xf32>
    %7 = arith.cmpf ogt, %5, %6 : vector<32x128xf32>
    %cst_6 = arith.constant 0.000000e+00 : f32
    %8 = vector.broadcast %cst_6 : f32 to vector<32x128xf32>
    %9 = arith.minimumf %5, %8 : vector<32x128xf32>
    %10 = math.exp %9 : vector<32x128xf32>
    %cst_7 = arith.constant 1.000000e+00 : f32
    %11 = vector.broadcast %cst_7 : f32 to vector<32x128xf32>
    %12 = arith.subf %10, %11 : vector<32x128xf32>
    %13 = arith.select %7, %5, %12 : vector<32x128xi1>, vector<32x128xf32>
    %c0_8 = arith.constant 0 : index
    %c0_9 = arith.constant 0 : index
    %14 = vector.load %arg4[%c0_8, %c0_9] : memref<128x128xf32, #tpu.memory_space<vmem>>, vector<128x128xf32>
    %cst_10 = arith.constant dense<0.000000e+00> : vector<32x128xf32>
    %15 = tpu.matmul %13, %14, %cst_10 {dimension_numbers = #tpu.dot_dimension_numbers<[1], [0], [0], [1], [0, 0, 1, 1], [], []>} : vector<32x128xf32>, vector<128x128xf32>, vector<32x128xf32> -> vector<32x128xf32>
    %c0_11 = arith.constant 0 : index
    %c0_12 = arith.constant 0 : index
    %16 = vector.load %arg5[%c0_11, %c0_12] : memref<1x128xf32, #tpu.memory_space<vmem>>, vector<1x128xf32>
    %17 = vector.broadcast %16 : vector<1x128xf32> to vector<32x128xf32>
    %18 = arith.addf %15, %17 : vector<32x128xf32>
    %19 = tpu.iota {dimensions = array<i32: 1>} : vector<32x128xi32>
    %c25_i32 = arith.constant 25 : i32
    %20 = vector.broadcast %c25_i32 : i32 to vector<32x128xi32>
    %21 = arith.cmpi sge, %19, %20 : vector<32x128xi32>
    %22 = math.exp %18 : vector<32x128xf32>
    %23 = arith.select %21, %22, %18 : vector<32x128xi1>, vector<32x128xf32>
    %c0_13 = arith.constant 0 : index
    %c0_14 = arith.constant 0 : index
    %24 = vector.load %arg6[%c0_13, %c0_14] : memref<32x128xf32, #tpu.memory_space<vmem>>, vector<32x128xf32>
    tpu.vector_store %arg6[%c0_13, %c0_14], %23 {strides = array<i32>} : memref<32x128xf32, #tpu.memory_space<vmem>>, vector<32x128xf32>,
    return
  }
  func.func @transform_0(%arg0: i32) -> (i32, i32) {
    %c0_i32 = arith.constant 0 : i32
    %c0_i32_0 = arith.constant 0 : i32
    return %arg0, %c0_i32 : i32, i32
  }
  func.func @transform_1(%arg0: i32) -> (i32, i32) {
    %c0_i32 = arith.constant 0 : i32
    %c0_i32_0 = arith.constant 0 : i32
    %c0_i32_1 = arith.constant 0 : i32
    return %c0_i32, %c0_i32_0 : i32, i32
  }
  func.func @transform_2(%arg0: i32) -> (i32, i32) {
    %c0_i32 = arith.constant 0 : i32
    %c0_i32_0 = arith.constant 0 : i32
    %c0_i32_1 = arith.constant 0 : i32
    return %c0_i32, %c0_i32_0 : i32, i32
  }
  func.func @transform_3(%arg0: i32) -> (i32, i32) {
    %c0_i32 = arith.constant 0 : i32
    %c0_i32_0 = arith.constant 0 : i32
    %c0_i32_1 = arith.constant 0 : i32
    return %c0_i32, %c0_i32_0 : i32, i32
  }
  func.func @transform_4(%arg0: i32) -> (i32, i32) {
    %c0_i32 = arith.constant 0 : i32
    %c0_i32_0 = arith.constant 0 : i32
    %c0_i32_1 = arith.constant 0 : i32
    return %c0_i32, %c0_i32_0 : i32, i32
  }
  func.func @transform_5(%arg0: i32) -> (i32, i32) {
    %c0_i32 = arith.constant 0 : i32
    %c0_i32_0 = arith.constant 0 : i32
    return %arg0, %c0_i32 : i32, i32
  }
}

</mosaic_0001>

<llo_original>
// kernel: tpu_custom_call.1
$region0: #{tpu_custom_call.1}
  #allocation0 [shape = 'u32[]', space=smem, size = 0x4, offset = 0x4, fixed_abs, tag = 'smem constant byte address 0x4 - core index']
  #allocation1 [shape = 'u32[144,128]{1,0:T(1,128)}', space=vmem, size = 0x12000, scoped, tag = 'internal scratch']
  %s0 = inlined_call_operand.vmem [shape: f32[64,16], index: 0, kind: input, shape index: {}]
  %s1 = inlined_call_operand.vmem [shape: f32[16,128], index: 1, kind: input, shape index: {}]
  %s2 = inlined_call_operand.vmem [shape: f32[1,128], index: 2, kind: input, shape index: {}]
  %s3 = inlined_call_operand.hbm [shape: f32[128,128], index: 3, kind: input, shape index: {}]
  %s4 = inlined_call_operand.vmem [shape: f32[1,128], index: 4, kind: input, shape index: {}]
  %s5 = inlined_call_operand.hbm [shape: f32[64,128], index: 5, kind: output, shape index: {}]
  %s6 = sld [smem:[#allocation0]]
  $region57: #{tpu_custom_call.1} parent=0
    _
  %s8 = ssub.s32 1, %s6
  %s9 = scalar_select 0, %s8, %s6
  $region1: #{tpu_custom_call.1} parent=0
    #allocation2 [shape = 'u8[65536]{0}', space=vmem, size = 0x10000, scoped, tag = 'input window, operand 3, single buffered']
    #allocation3 [shape = 's32[2]{0}', space=sflag, size = 0x8, scoped, tag = 'scoped memory for tpu_custom_call.1']
    #allocation4 [shape = 's32[2]{0}', space=sflag, size = 0x8, scoped, tag = 'scoped memory for tpu_custom_call.1']
    #allocation5 [shape = 'u8[32768]{0}', space=vmem, size = 0x8000, scoped, tag = 'output window, operand 0']
    %10 = vsyncpa [#allocation3], 0
    %11 = vsyncpa [#allocation4], 0
    %s12 = scalar_lea.sflag [#allocation4], 1
    %13 = vsyncpa %s12, 0
    loop: start=0, step=1, limit=4
    $region2: #{tpu_custom_call.1} parent=1 // loop_pre_header
      _
    $region3: #{tpu_custom_call.1} parent=1 // loop_header
      %s15 = sphi 0, %s19
      %p16 = scmp.ge.s32.totalorder %s15, 4
      %s25 = sphi 0, %s27
      %s28 = sphi 0, %s25
      %s29 = sphi 0, %s28
      %s45 = sphi 0, %s29
      %s49 = sphi 0, %s49
      %s51 = sphi 0, %s49
      %s52 = sphi 0, %s51
      %s66 = sphi 0, %s52
      %s70 = sphi 0, %s70
      %s72 = sphi 0, %s70
      %s73 = sphi 0, %s72
      %s87 = sphi 0, %s73
      %s91 = sphi 0, %s91
      %s93 = sphi 0, %s91
      %s94 = sphi 0, %s93
      %s108 = sphi 0, %s94
      %s112 = sphi 0, %s112
      %s114 = sphi 0, %s112
      %s115 = sphi 0, %s114
      %s129 = sphi 0, %s115
      %s135 = sphi 0, %s137
      %s138 = sphi 0, %s135
      %s139 = sphi 0, %s138
      %s155 = sphi 0, %s139
    $region4: #{tpu_custom_call.1} parent=1 // loop_header_branch
      %18 = sbr.rel (%p16) target = $region8
    $region5: #{tpu_custom_call.1} parent=1 // loop_body
      %s20 = ssub.s32 %s15, 1
      %s21 = ssub.s32 %s15, 2
      %s22 = sadd.s32 %s15, 1
      %s23 = ssub.s32 %s15, %s22
      %p24 = scmp.eq.s32.totalorder %s23, 0
      %s26 = sadd.s32 %s25, 1
      %s27 = scalar_select %p24, %s25, %s26
      %p30 = pneg %p24
      %p31 = scmp.eq.s32.totalorder %s15, 1
      %p32 = por %p30, %p31
      %p33 = scmp.ne.s32.totalorder %s25, %s28
      %p34 = scmp.eq.s32.totalorder %s15, 0
      %p35 = por %p33, %p34
      %p36 = scmp.ne.s32.totalorder %s25, %s28
      %p37 = scmp.eq.s32.totalorder %s20, 1
      %p38 = por %p36, %p37
      %p39 = scmp.ne.s32.totalorder %s28, %s29
      %p40 = scmp.eq.s32.totalorder %s20, 0
      %p41 = por %p39, %p40
      %p42 = scmp.ne.s32.totalorder %s28, %s29
      %p43 = scmp.eq.s32.totalorder %s21, 1
      %p44 = por %p42, %p43
      %p46 = scmp.ne.s32.totalorder %s29, %s45
      %p47 = scmp.eq.s32.totalorder %s21, 0
      %p48 = por %p46, %p47
      %s50 = sadd.s32 %s49, 1
      %p53 = scmp.eq.s32.totalorder %s15, 1
      %p54 = scmp.ne.s32.totalorder %s49, %s51
      %p55 = scmp.eq.s32.totalorder %s15, 0
      %p56 = por %p54, %p55
      %p57 = scmp.ne.s32.totalorder %s49, %s51
      %p58 = scmp.eq.s32.totalorder %s20, 1
      %p59 = por %p57, %p58
      %p60 = scmp.ne.s32.totalorder %s51, %s52
      %p61 = scmp.eq.s32.totalorder %s20, 0
      %p62 = por %p60, %p61
      %p63 = scmp.ne.s32.totalorder %s51, %s52
      %p64 = scmp.eq.s32.totalorder %s21, 1
      %p65 = por %p63, %p64
      %p67 = scmp.ne.s32.totalorder %s52, %s66
      %p68 = scmp.eq.s32.totalorder %s21, 0
      %p69 = por %p67, %p68
      %s71 = sadd.s32 %s70, 1
      %p74 = scmp.eq.s32.totalorder %s15, 1
      %p75 = scmp.ne.s32.totalorder %s70, %s72
      %p76 = scmp.eq.s32.totalorder %s15, 0
      %p77 = por %p75, %p76
      %p78 = scmp.ne.s32.totalorder %s70, %s72
      %p79 = scmp.eq.s32.totalorder %s20, 1
      %p80 = por %p78, %p79
      %p81 = scmp.ne.s32.totalorder %s72, %s73
      %p82 = scmp.eq.s32.totalorder %s20, 0
      %p83 = por %p81, %p82
      %p84 = scmp.ne.s32.totalorder %s72, %s73
      %p85 = scmp.eq.s32.totalorder %s21, 1
      %p86 = por %p84, %p85
      %p88 = scmp.ne.s32.totalorder %s73, %s87
      %p89 = scmp.eq.s32.totalorder %s21, 0
      %p90 = por %p88, %p89
      %s92 = sadd.s32 %s91, 1
      %p95 = scmp.eq.s32.totalorder %s15, 1
      %p96 = scmp.ne.s32.totalorder %s91, %s93
      %p97 = scmp.eq.s32.totalorder %s15, 0
      %p98 = por %p96, %p97
      %p99 = scmp.ne.s32.totalorder %s91, %s93
      %p100 = scmp.eq.s32.totalorder %s20, 1
      %p101 = por %p99, %p100
      %p102 = scmp.ne.s32.totalorder %s93, %s94
      %p103 = scmp.eq.s32.totalorder %s20, 0
      %p104 = por %p102, %p103
      %p105 = scmp.ne.s32.totalorder %s93, %s94
      %p106 = scmp.eq.s32.totalorder %s21, 1
      %p107 = por %p105, %p106
      %p109 = scmp.ne.s32.totalorder %s94, %s108
      %p110 = scmp.eq.s32.totalorder %s21, 0
      %p111 = por %p109, %p110
      %s113 = sadd.s32 %s112, 1
      %p116 = scmp.eq.s32.totalorder %s15, 1
      %p117 = scmp.ne.s32.totalorder %s112, %s114
      %p118 = scmp.eq.s32.totalorder %s15, 0
      %p119 = por %p117, %p118
      %p120 = scmp.ne.s32.totalorder %s112, %s114
      %p121 = scmp.eq.s32.totalorder %s20, 1
      %p122 = por %p120, %p121
      %p123 = scmp.ne.s32.totalorder %s114, %s115
      %p124 = scmp.eq.s32.totalorder %s20, 0
      %p125 = por %p123, %p124
      %p126 = scmp.ne.s32.totalorder %s114, %s115
      %p127 = scmp.eq.s32.totalorder %s21, 1
      %p128 = por %p126, %p127
      %p130 = scmp.ne.s32.totalorder %s115, %s129
      %p131 = scmp.eq.s32.totalorder %s21, 0
      %p132 = por %p130, %p131
      %s133 = ssub.s32 %s15, %s22
      %p134 = scmp.eq.s32.totalorder %s133, 0
      %s136 = sadd.s32 %s135, 1
      %s137 = scalar_select %p134, %s135, %s136
      %p140 = pneg %p134
      %p141 = scmp.eq.s32.totalorder %s15, 1
      %p142 = por %p140, %p141
      %p143 = scmp.ne.s32.totalorder %s135, %s138
      %p144 = scmp.eq.s32.totalorder %s15, 0
      %p145 = por %p143, %p144
      %p146 = scmp.ne.s32.totalorder %s135, %s138
      %p147 = scmp.eq.s32.totalorder %s20, 1
      %p148 = por %p146, %p147
      %p149 = scmp.ne.s32.totalorder %s138, %s139
      %p150 = scmp.eq.s32.totalorder %s20, 0
      %p151 = por %p149, %p150
      %p152 = scmp.ne.s32.totalorder %s138, %s139
      %p153 = scmp.eq.s32.totalorder %s21, 1
      %p154 = por %p152, %p153
      %p156 = scmp.ne.s32.totalorder %s139, %s155
      %p157 = scmp.eq.s32.totalorder %s21, 0
      %p158 = por %p156, %p157
      %p159 = scmp.le.s32.totalorder 1, %s15
      %p160 = scmp.lt.s32.totalorder %s15, 3
      %p161 = pnand %p159, %p160
      %p162 = pneg %p161
      // Predicated region
      $region9: #{tpu_custom_call.1} parent=5 // pred_check
        _
      $region10: #{tpu_custom_call.1} parent=5 // pred_check_branch
        %164 = sbr.rel (%p161) target = $region12
      $region11: #{tpu_custom_call.1} parent=5 // pred_region
        %s165 = ssub.s32 %s15, 1
        // Predicated region
        $region13: #{tpu_custom_call.1} parent=11 // pred_check
          %p166 = pneg %p62
        $region14: #{tpu_custom_call.1} parent=11 // pred_check_branch
          %168 = sbr.rel (%p166) target = $region16
        $region15: #{tpu_custom_call.1} parent=11 // pred_region
          _
        $region16: #{tpu_custom_call.1} parent=11 // pred_fallthru
          _
        // Predicated region
        $region17: #{tpu_custom_call.1} parent=11 // pred_check
          %p169 = pneg %p83
        $region18: #{tpu_custom_call.1} parent=11 // pred_check_branch
          %171 = sbr.rel (%p169) target = $region20
        $region19: #{tpu_custom_call.1} parent=11 // pred_region
          _
        $region20: #{tpu_custom_call.1} parent=11 // pred_fallthru
          _
        // Predicated region
        $region21: #{tpu_custom_call.1} parent=11 // pred_check
          %p172 = pneg %p104
        $region22: #{tpu_custom_call.1} parent=11 // pred_check_branch
          %174 = sbr.rel (%p172) target = $region24
        $region23: #{tpu_custom_call.1} parent=11 // pred_region
          %s176 = ssub.s32 2048, 2048
          %177 = vsyncadd [#allocation3], %s176
          %s178 = sshll.u32 [#allocation2], 4
          %s179 = int_to_ptr.vmem [resolvable:$true] %s178
          %184 = dma.hbm_to_vmem [thread:$0]  %s3, 2048, %s179, [#allocation3], 128, 128, 8
        $region24: #{tpu_custom_call.1} parent=11 // pred_fallthru
          _
        // Predicated region
        $region25: #{tpu_custom_call.1} parent=11 // pred_check
          %p185 = pneg %p125
        $region26: #{tpu_custom_call.1} parent=11 // pred_check_branch
          %187 = sbr.rel (%p185) target = $region28
        $region27: #{tpu_custom_call.1} parent=11 // pred_region
          _
        $region28: #{tpu_custom_call.1} parent=11 // pred_fallthru
          _
      $region12: #{tpu_custom_call.1} parent=5 // pred_fallthru
        _
      %p188 = scmp.lt.s32.totalorder %s15, 2
      // Predicated region
      $region29: #{tpu_custom_call.1} parent=5 // pred_check
        %p189 = pneg %p188
      $region30: #{tpu_custom_call.1} parent=5 // pred_check_branch
        %191 = sbr.rel (%p189) target = $region32
      $region31: #{tpu_custom_call.1} parent=5 // pred_region
        // Predicated region
        $region33: #{tpu_custom_call.1} parent=31 // pred_check
          %p192 = pneg %p35
        $region34: #{tpu_custom_call.1} parent=31 // pred_check_branch
          %194 = sbr.rel (%p192) target = $region36
        $region35: #{tpu_custom_call.1} parent=31 // pred_region
          %s195 = smul.u32 4, %s15
          %p196 = scmp.lt.s32.totalorder %s195, 7
          %s197 = scalar_select %p196, %s195, 7
          %s198 = smul.addr %s197, 8
          %s199 = scalar_lea.vmem %s0, %s198
          %s200 = smul.u32 4, %s15
        $region36: #{tpu_custom_call.1} parent=31 // pred_fallthru
          _
      $region32: #{tpu_custom_call.1} parent=5 // pred_fallthru
        _
      %p201 = scmp.le.s32.totalorder 1, %s15
      %p202 = scmp.lt.s32.totalorder %s15, 3
      %p203 = pnand %p201, %p202
      %p204 = pneg %p203
      // Predicated region
      $region37: #{tpu_custom_call.1} parent=5 // pred_check
        _
      $region38: #{tpu_custom_call.1} parent=5 // pred_check_branch
        %206 = sbr.rel (%p203) target = $region40
      $region39: #{tpu_custom_call.1} parent=5 // pred_region
        %s207 = ssub.s32 %s15, 1
        // Predicated region
        $region41: #{tpu_custom_call.1} parent=39 // pred_check
          %p208 = pneg %p104
        $region42: #{tpu_custom_call.1} parent=39 // pred_check_branch
          %210 = sbr.rel (%p208) target = $region44
        $region43: #{tpu_custom_call.1} parent=39 // pred_region
          %211 = dma.done [#allocation3], 2048
        $region44: #{tpu_custom_call.1} parent=39 // pred_fallthru
          _
        %s212 = smul.u32 4, %s20
        %p213 = scmp.lt.s32.totalorder %s212, 7
        %s214 = scalar_select %p213, %s212, 7
        %s215 = smul.addr %s214, 8
        %s216 = scalar_lea.vmem %s0, %s215
        %p217 = pneg %p41
        %p218 = pneg %p38
        %p219 = pneg %p62
        %p220 = pneg %p59
        %p221 = pneg %p83
        %p222 = pneg %p80
        %p223 = pneg %p104
        %p224 = pneg %p101
        %p225 = pneg %p125
        %p226 = pneg %p122
        %p227 = pneg %p151
        %p228 = pneg %p148
        %s229 = sand.u32 %s138, 1
        %s230 = scalar_lea.sflag [#allocation4], %s229
        %s231 = sand.u32 %s138, 1
        %s232 = smul.addr %s231, 32
        %s233 = scalar_lea.vmem [#allocation5], %s232
        %s234 = smul.u32 4, %s20
        %p235 = scmp.lt.s32.totalorder %s234, 7
        %s236 = scalar_select %p235, %s234, 7
        %s237 = smul.addr %s236, 8
        %s238 = scalar_lea.vmem %s0, %s237
        %s239 = smul.u32 4, %s20
        %s240 = smul.u32 4, %s20
        %v241 = vld [vmem:[%s238] sm:$0xff]
        %v242 = vld [vmem:[%s238 + $0x8] sm:$0xff]
        %v243 = vld [vmem:[%s238 + $0x10] sm:$0xff]
        %v244 = vld [vmem:[%s238 + $0x18] sm:$0xff]
        %v245 = vld [vmem:[%s1] sm:$0xff]
        %v246 = vld [vmem:[%s1 + $0x8] sm:$0xff]
        %v247 = vld [vmem:[%s2] sm:$0x1]
        %v249 = vlaneseq
        %v250 = vshrl.u32 %v249, 7
        %v251 = vsub.s32 0, %v250
        %v252 = vrot.slane %v247, %v251
        %vm254 = vcmask 130048
        %v256 = vsel %vm254, %v241, 0
        %v259 = vsel %vm254, %v242, 0
        %v262 = vsel %vm254, %v243, 0
        %v265 = vsel %vm254, %v244, 0
        %267 = vmatprep.subr.mxu0 0.0
        %268 = vmatpush1.msra.mxu0 0.0
        %269 = vmatprep.subr.mxu0 0.0
        %270 = vmatpush1.msra.mxu0 0.0
        %271 = vmatprep.subr.mxu0 0.0
        %272 = vmatpush1.msra.mxu0 0.0
        %273 = vmatprep.subr.mxu0 0.0
        %274 = vmatpush1.msra.mxu0 0.0
        %275 = vmatprep.subr.mxu0 0.0
        %276 = vmatpush1.msra.mxu0 0.0
        %277 = vmatprep.subr.mxu0 0.0
        %278 = vmatpush1.msra.mxu0 0.0
        %279 = vmatprep.subr.mxu0 0.0
        %280 = vmatpush1.msra.mxu0 0.0
        %281 = vmatprep.subr.mxu0 0.0
        %282 = vmatpush1.msra.mxu0 0.0
        %283 = vmatprep.subr.mxu0 0.0
        %284 = vmatpush1.msra.mxu0 0.0
        %285 = vmatprep.subr.mxu0 0.0
        %286 = vmatpush1.msra.mxu0 0.0
        %287 = vmatprep.subr.mxu0 0.0
        %288 = vmatpush1.msra.mxu0 0.0
        %289 = vmatprep.subr.mxu0 0.0
        %290 = vmatpush1.msra.mxu0 0.0
        %291 = vmatprep.subr.mxu0 0.0
        %292 = vmatpush1.msra.mxu0 0.0
        %293 = vmatprep.subr.mxu0 0.0
        %294 = vmatpush1.msra.mxu0 0.0
        %295 = vmatprep.subr.mxu0 0.0
        %296 = vmatpush1.msra.mxu0 %v246
        %297 = vmatprep.subr.mxu0 0.0
        %298 = vmatpush1.msra.mxu0 %v245
        %299 = vmatprep.subr.mxu0 0.0
        %300 = vmatpush2.msra.mxu0 0.0
        %301 = vmatprep.subr.mxu0 0.0
        %302 = vmatpush2.msra.mxu0 0.0
        %303 = vmatprep.subr.mxu0 0.0
        %304 = vmatpush2.msra.mxu0 0.0
        %305 = vmatprep.subr.mxu0 0.0
        %306 = vmatpush2.msra.mxu0 0.0
        %307 = vmatprep.subr.mxu0 0.0
        %308 = vmatpush2.msra.mxu0 0.0
        %309 = vmatprep.subr.mxu0 0.0
        %310 = vmatpush2.msra.mxu0 0.0
        %311 = vmatprep.subr.mxu0 0.0
        %312 = vmatpush2.msra.mxu0 0.0
        %313 = vmatprep.subr.mxu0 0.0
        %314 = vmatpush2.msra.mxu0 0.0
        %315 = vmatprep.subr.mxu0 0.0
        %316 = vmatpush2.msra.mxu0 0.0
        %317 = vmatprep.subr.mxu0 0.0
        %318 = vmatpush2.msra.mxu0 0.0
        %319 = vmatprep.subr.mxu0 0.0
        %320 = vmatpush2.msra.mxu0 0.0
        %321 = vmatprep.subr.mxu0 0.0
        %322 = vmatpush2.msra.mxu0 0.0
        %323 = vmatprep.subr.mxu0 0.0
        %324 = vmatpush2.msra.mxu0 0.0
        %325 = vmatprep.subr.mxu0 0.0
        %326 = vmatpush2.msra.mxu0 0.0
        %327 = vmatprep.subr.mxu0 0.0
        %328 = vmatpush2.msra.mxu0 0.0
        %329 = vmatprep.subr.mxu0 0.0
        %330 = vmatpush2.msra.mxu0 0.0
        %331 = vmatprep.mubr.f32.mxu0 0.0
        %332 = vmatmul.mubr.f32.gmra.mxu0 %v256
        %v333 = vpop.f32.mrf.mxu0
        %v334 = vadd.f32 %v252, %v333
        %v335 = vpop.f32.mrf.mxu0
        %336 = vmatprep.mubr.f32.mxu0 0.0
        %337 = vmatmul.mubr.f32.gmra.mxu0 %v259
        %v338 = vpop.f32.mrf.mxu0
        %v339 = vadd.f32 %v252, %v338
        %v340 = vpop.f32.mrf.mxu0
        %341 = vmatprep.mubr.f32.mxu0 0.0
        %342 = vmatmul.mubr.f32.gmra.mxu0 %v262
        %v343 = vpop.f32.mrf.mxu0
        %v344 = vadd.f32 %v252, %v343
        %v345 = vpop.f32.mrf.mxu0
        %346 = vmatprep.mubr.f32.mxu0 0.0
        %347 = vmatmul.mubr.f32.gmra.mxu0 %v265
        %v348 = vpop.f32.mrf.mxu0
        %v349 = vadd.f32 %v252, %v348
        %v350 = vpop.f32.mrf.mxu0
        %351 = vdwg.mxu0
        %vm352 = vcmp.gt.f32.partialorder %v334, 0.0
        %vm353 = vcmp.gt.f32.partialorder %v339, 0.0
        %vm354 = vcmp.gt.f32.partialorder %v344, 0.0
        %vm355 = vcmp.gt.f32.partialorder %v349, 0.0
        %v356 = vmin.f32 %v334, 0.0
        %v357 = vmin.f32 %v339, 0.0
        %v358 = vmin.f32 %v344, 0.0
        %v359 = vmin.f32 %v349, 0.0
        %v360 = vmul.f32 %v356, 1.442695
        %v361 = vpow.pop %v360
        %v362 = vmul.f32 %v357, 1.442695
        %v363 = vpow.pop %v362
        %v364 = vmul.f32 %v358, 1.442695
        %v365 = vpow.pop %v364
        %v366 = vmul.f32 %v359, 1.442695
        %v367 = vpow.pop %v366
        %v368 = vsub.f32 %v361, 1.0
        %v369 = vsub.f32 %v363, 1.0
        %v370 = vsub.f32 %v365, 1.0
        %v371 = vsub.f32 %v367, 1.0
        %v372 = vsel %vm352, %v334, %v368
        %v373 = vsel %vm353, %v339, %v369
        %v374 = vsel %vm354, %v344, %v370
        %v375 = vsel %vm355, %v349, %v371
        %v376 = vld [vmem:[#allocation2] sm:$0xff]
        %v377 = vld [vmem:[#allocation2 + $0x8] sm:$0xff]
        %v378 = vld [vmem:[#allocation2 + $0x10] sm:$0xff]
        %v379 = vld [vmem:[#allocation2 + $0x18] sm:$0xff]
        %v380 = vld [vmem:[#allocation2 + $0x20] sm:$0xff]
        %v381 = vld [vmem:[#allocation2 + $0x28] sm:$0xff]
        %v382 = vld [vmem:[#allocation2 + $0x30] sm:$0xff]
        %v383 = vld [vmem:[#allocation2 + $0x38] sm:$0xff]
        %v384 = vld [vmem:[#allocation2 + $0x40] sm:$0xff]
        %v385 = vld [vmem:[#allocation2 + $0x48] sm:$0xff]
        %v386 = vld [vmem:[#allocation2 + $0x50] sm:$0xff]
        %v387 = vld [vmem:[#allocation2 + $0x58] sm:$0xff]
        %v388 = vld [vmem:[#allocation2 + $0x60] sm:$0xff]
        %v389 = vld [vmem:[#allocation2 + $0x68] sm:$0xff]
        %v390 = vld [vmem:[#allocation2 + $0x70] sm:$0xff]
        %v391 = vld [vmem:[#allocation2 + $0x78] sm:$0xff]
        %v392 = vld [vmem:[%s4] sm:$0x1]
        %v394 = vlaneseq
        %v395 = vshrl.u32 %v394, 7
        %v396 = vsub.s32 0, %v395
        %v397 = vrot.slane %v392, %v396
        %399 = vmatprep.subr.mxu0 0.0
        %400 = vmatpush1.msra.mxu0 %v391
        %401 = vmatprep.subr.mxu0 0.0
        %402 = vmatpush1.msra.mxu0 %v390
        %403 = vmatprep.subr.mxu0 0.0
        %404 = vmatpush1.msra.mxu0 %v389
        %405 = vmatprep.subr.mxu0 0.0
        %406 = vmatpush1.msra.mxu0 %v388
        %407 = vmatprep.subr.mxu0 0.0
        %408 = vmatpush1.msra.mxu0 %v387
        %409 = vmatprep.subr.mxu0 0.0
        %410 = vmatpush1.msra.mxu0 %v386
        %411 = vmatprep.subr.mxu0 0.0
        %412 = vmatpush1.msra.mxu0 %v385
        %413 = vmatprep.subr.mxu0 0.0
        %414 = vmatpush1.msra.mxu0 %v384
        %415 = vmatprep.subr.mxu0 0.0
        %416 = vmatpush1.msra.mxu0 %v383
        %417 = vmatprep.subr.mxu0 0.0
        %418 = vmatpush1.msra.mxu0 %v382
        %419 = vmatprep.subr.mxu0 0.0
        %420 = vmatpush1.msra.mxu0 %v381
        %421 = vmatprep.subr.mxu0 0.0
        %422 = vmatpush1.msra.mxu0 %v380
        %423 = vmatprep.subr.mxu0 0.0
        %424 = vmatpush1.msra.mxu0 %v379
        %425 = vmatprep.subr.mxu0 0.0
        %426 = vmatpush1.msra.mxu0 %v378
        %427 = vmatprep.subr.mxu0 0.0
        %428 = vmatpush1.msra.mxu0 %v377
        %429 = vmatprep.subr.mxu0 0.0
        %430 = vmatpush1.msra.mxu0 %v376
        %431 = vmatprep.subr.mxu0 0.0
        %432 = vmatpush2.msra.mxu0 0.0
        %433 = vmatprep.subr.mxu0 0.0
        %434 = vmatpush2.msra.mxu0 0.0
        %435 = vmatprep.subr.mxu0 0.0
        %436 = vmatpush2.msra.mxu0 0.0
        %437 = vmatprep.subr.mxu0 0.0
        %438 = vmatpush2.msra.mxu0 0.0
        %439 = vmatprep.subr.mxu0 0.0
        %440 = vmatpush2.msra.mxu0 0.0
        %441 = vmatprep.subr.mxu0 0.0
        %442 = vmatpush2.msra.mxu0 0.0
        %443 = vmatprep.subr.mxu0 0.0
        %444 = vmatpush2.msra.mxu0 0.0
        %445 = vmatprep.subr.mxu0 0.0
        %446 = vmatpush2.msra.mxu0 0.0
        %447 = vmatprep.subr.mxu0 0.0
        %448 = vmatpush2.msra.mxu0 0.0
        %449 = vmatprep.subr.mxu0 0.0
        %450 = vmatpush2.msra.mxu0 0.0
        %451 = vmatprep.subr.mxu0 0.0
        %452 = vmatpush2.msra.mxu0 0.0
        %453 = vmatprep.subr.mxu0 0.0
        %454 = vmatpush2.msra.mxu0 0.0
        %455 = vmatprep.subr.mxu0 0.0
        %456 = vmatpush2.msra.mxu0 0.0
        %457 = vmatprep.subr.mxu0 0.0
        %458 = vmatpush2.msra.mxu0 0.0
        %459 = vmatprep.subr.mxu0 0.0
        %460 = vmatpush2.msra.mxu0 0.0
        %461 = vmatprep.subr.mxu0 0.0
        %462 = vmatpush2.msra.mxu0 0.0
        %463 = vmatprep.mubr.f32.mxu0 0.0
        %464 = vmatmul.mubr.f32.gmra.mxu0 %v372
        %v465 = vpop.f32.mrf.mxu0
        %v466 = vadd.f32 %v397, %v465
        %v467 = vpop.f32.mrf.mxu0
        %468 = vmatprep.mubr.f32.mxu0 0.0
        %469 = vmatmul.mubr.f32.gmra.mxu0 %v373
        %v470 = vpop.f32.mrf.mxu0
        %v471 = vadd.f32 %v397, %v470
        %v472 = vpop.f32.mrf.mxu0
        %473 = vmatprep.mubr.f32.mxu0 0.0
        %474 = vmatmul.mubr.f32.gmra.mxu0 %v374
        %v475 = vpop.f32.mrf.mxu0
        %v476 = vadd.f32 %v397, %v475
        %v477 = vpop.f32.mrf.mxu0
        %478 = vmatprep.mubr.f32.mxu0 0.0
        %479 = vmatmul.mubr.f32.gmra.mxu0 %v375
        %v480 = vpop.f32.mrf.mxu0
        %v481 = vadd.f32 %v397, %v480
        %v482 = vpop.f32.mrf.mxu0
        %483 = vdwg.mxu0
        %v484 = vlaneseq
        %v485 = vand.u32 %v484, 127
        %vm486 = vcmp.ge.s32.totalorder %v485, 25
        %v487 = vmul.f32 %v466, 1.442695
        %v488 = vpow.pop %v487
        %v489 = vmul.f32 %v471, 1.442695
        %v490 = vpow.pop %v489
        %v491 = vmul.f32 %v476, 1.442695
        %v492 = vpow.pop %v491
        %v493 = vmul.f32 %v481, 1.442695
        %v494 = vpow.pop %v493
        %v495 = vsel %vm486, %v488, %v466
        %v496 = vsel %vm486, %v490, %v471
        %v497 = vsel %vm486, %v492, %v476
        %v498 = vsel %vm486, %v494, %v481
        %499 = vst [vmem:[%s233] sm:$0xff] %v495
        %500 = vst [vmem:[%s233 + $0x8] sm:$0xff] %v496
        %501 = vst [vmem:[%s233 + $0x10] sm:$0xff] %v497
        %502 = vst [vmem:[%s233 + $0x18] sm:$0xff] %v498
        %s503 = sand.u32 %s138, 1
        %s504 = scalar_lea.sflag [#allocation4], %s503
        %s505 = sand.u32 %s138, 1
        %s506 = smul.addr %s505, 32
        %s507 = scalar_lea.vmem [#allocation5], %s506
        // Predicated region
        $region45: #{tpu_custom_call.1} parent=39 // pred_check
          %p508 = pneg %p148
        $region46: #{tpu_custom_call.1} parent=39 // pred_check_branch
          %510 = sbr.rel (%p508) target = $region48
        $region47: #{tpu_custom_call.1} parent=39 // pred_region
          %s511 = smul.u32 4, %s20
          %s513 = ssub.s32 512, 512
          %514 = vsyncadd %s504, %s513
          %s515 = smul.addr %s511, 128
          %s516 = scalar_lea.hbm %s5, %s515
          %s517 = sshll.u32 %s507, 4
          %s518 = int_to_ptr.vmem [resolvable:$true] %s517
          %523 = dma.vmem_to_hbm [thread:$0]  %s518, 512, %s516, %s504, 128, 128, 8
        $region48: #{tpu_custom_call.1} parent=39 // pred_fallthru
          _
      $region40: #{tpu_custom_call.1} parent=5 // pred_fallthru
        _
      %p524 = scmp.le.s32.totalorder 2, %s15
      // Predicated region
      $region49: #{tpu_custom_call.1} parent=5 // pred_check
        %p525 = pneg %p524
      $region50: #{tpu_custom_call.1} parent=5 // pred_check_branch
        %527 = sbr.rel (%p525) target = $region52
      $region51: #{tpu_custom_call.1} parent=5 // pred_region
        %s528 = ssub.s32 %s15, 2
        // Predicated region
        $region53: #{tpu_custom_call.1} parent=51 // pred_check
          %p529 = pneg %p154
        $region54: #{tpu_custom_call.1} parent=51 // pred_check_branch
          %531 = sbr.rel (%p529) target = $region56
        $region55: #{tpu_custom_call.1} parent=51 // pred_region
          %s532 = sand.u32 %s139, 1
          %s533 = scalar_lea.sflag [#allocation4], %s532
          %s534 = sand.u32 %s139, 1
          %s535 = smul.addr %s534, 32
          %s536 = scalar_lea.vmem [#allocation5], %s535
          %537 = dma.done %s533, 512
        $region56: #{tpu_custom_call.1} parent=51 // pred_fallthru
          _
      $region52: #{tpu_custom_call.1} parent=5 // pred_fallthru
        _
    $region6: #{tpu_custom_call.1} parent=1 // loop_footer
      %s19 = sadd.s32 1, %s15
    $region7: #{tpu_custom_call.1} parent=1 // loop_footer_branch
      %14 = sbr.rel target = $region3
    $region8: #{tpu_custom_call.1} parent=1 // loop_exit
      _
    %538 = vsyncpa [#allocation3], 1
    %s539 = scalar_lea.sflag [#allocation3], 1
    %540 = vsyncpa %s539, 1
    %541 = vsyncpa [#allocation4], 1
    %s542 = scalar_lea.sflag [#allocation4], 1
    %543 = vsyncpa %s542, 1

</llo_original>
